<compile_context>
chip_gen: v7x
topology: tpu7x:2x2x1
jax: 0.10.0
libtpu: 0.0.40
codegen_flags: <defaults>
</compile_context>

<pallas_src>
import jax
import jax.numpy as jnp
import numpy as np
from jax.experimental import pallas as pl
from jax.experimental.pallas import tpu as pltpu


def _round_up(n: int, m: int) -> int:
    return ((n + m - 1) // m) * m


# -----------------------------------------------------------------------------
# Pallas kernel
# -----------------------------------------------------------------------------
def time2vec_kernel(x_ref, wf_ref, pf_ref, o_ref):
    # x_ref: [bm, 1]  wf_ref / pf_ref: [1, D]  o_ref: [bm, D]
    y = x_ref[...] * wf_ref[...] + pf_ref[...]              # broadcast -> [bm, D]
    col = jax.lax.broadcasted_iota(jnp.int32, y.shape, 1)   # lane (feature) index
    # column 0 is the linear (w_0, p_0) term; columns 1.. get sin().
    o_ref[...] = jnp.where(col == 0, y, jnp.sin(y)).astype(o_ref.dtype)


# -----------------------------------------------------------------------------
# Wrapper
# -----------------------------------------------------------------------------
def time2vec_pallas(inputs, w_0, p_0, W, P, *, block_rows=1024):
    """inputs: [B, T]; w_0, p_0: [1, 1]; W, P: [1, time_dim - 1].

    Returns [B, T, time_dim] == torch.cat([x*w0+p0, sin(x*W+P)], -1).
    """
    B, T = inputs.shape
    D = W.shape[1] + 1
    M = B * T

    # Fuse the parameters once, outside the kernel: [w_0 | W], [p_0 | P].
    wf = jnp.concatenate([w_0, W], axis=1).astype(jnp.float32)   # [1, D]
    pf = jnp.concatenate([p_0, P], axis=1).astype(jnp.float32)   # [1, D]

    xc = inputs.reshape(M, 1).astype(jnp.float32)                # rows on sublanes

    bm = min(block_rows, _round_up(M, 8))                        # sublane-aligned tile
    Mp = _round_up(M, bm)
    if Mp != M:
        xc = jnp.pad(xc, ((0, Mp - M), (0, 0)))

    out = pl.pallas_call(
        time2vec_kernel,
        out_shape=jax.ShapeDtypeStruct((Mp, D), jnp.float32),
        grid_spec=pltpu.PrefetchScalarGridSpec(
            num_scalar_prefetch=0,
            grid=(Mp // bm,),
            in_specs=[
                pl.BlockSpec((bm, 1), lambda i: (i, 0)),   # x row chunk
                pl.BlockSpec((1, D), lambda i: (0, 0)),    # fused weights  [w0 | W]
                pl.BlockSpec((1, D), lambda i: (0, 0)),    # fused phases   [p0 | P]
            ],
            out_specs=pl.BlockSpec((bm, D), lambda i: (i, 0)),
        ),
        compiler_params=pltpu.CompilerParams(
            dimension_semantics=("parallel",)),            # rows are independent
    )(xc, wf, pf)

    return out[:M].reshape(B, T, D)


# -----------------------------------------------------------------------------
# Pure-JAX reference (mirrors the PyTorch code verbatim) for verification
# -----------------------------------------------------------------------------
def time2vec_ref(inputs, w_0, p_0, W, P):
    v1 = jnp.sin(jnp.matmul(inputs[..., None], W) + P)   # [B, T, D-1]
    v0 = jnp.matmul(inputs[..., None], w_0) + p_0        # [B, T, 1]
    return jnp.concatenate([v0, v1], axis=-1)


# -----------------------------------------------------------------------------
if __name__ == "__main__":
    B, T, TIME_DIM = 4, 16, 32

    key = jax.random.PRNGKey(0)
    k_x, k_w0, k_p0, k_W, k_P = jax.random.split(key, 5)

    x = jax.random.normal(k_x, (B, T), dtype=jnp.float32)
    w_0 = jax.random.normal(k_w0, (1, 1), dtype=jnp.float32)
    p_0 = jax.random.normal(k_p0, (1, 1), dtype=jnp.float32)
    W = jax.random.normal(k_W, (1, TIME_DIM - 1), dtype=jnp.float32)
    P = jax.random.normal(k_P, (1, TIME_DIM - 1), dtype=jnp.float32)

    out = time2vec_pallas(x, w_0, p_0, W, P)
    out = jax.block_until_ready(out)

    ref = time2vec_ref(x, w_0, p_0, W, P)
    assert out.shape == (B, T, TIME_DIM), out.shape
    np.testing.assert_allclose(np.asarray(out), np.asarray(ref),
                               rtol=1e-5, atol=1e-5)
    print("KERNEL_OK")
</pallas_src>

<mosaic_0001>
module attributes {stable_mosaic.version = 11 : i64} {
  func.func @time2vec_kernel(%arg0: i32, %arg1: memref<64x1xf32, #tpu.memory_space<vmem>>, %arg2: memref<1x32xf32, #tpu.memory_space<vmem>>, %arg3: memref<1x32xf32, #tpu.memory_space<vmem>>, %arg4: memref<64x32xf32, #tpu.memory_space<vmem>>) attributes {dimension_semantics = [#tpu.dimension_semantics<parallel>], iteration_bounds = array<i64: 1>, scalar_prefetch = 0 : i64, scratch_operands = 0 : i64, tpu.core_type = #tpu.core_type<tc>, window_params = [{transform_indices = @transform_0, window_bounds = array<i64: 64, 1>}, {pipeline_mode = #tpu.pipeline_mode<synchronous>, transform_indices = @transform_1, window_bounds = array<i64: 1, 32>}, {pipeline_mode = #tpu.pipeline_mode<synchronous>, transform_indices = @transform_2, window_bounds = array<i64: 1, 32>}, {transform_indices = @transform_3, window_bounds = array<i64: 64, 32>}]} {
    %c0 = arith.constant 0 : index
    %c0_0 = arith.constant 0 : index
    %0 = vector.load %arg1[%c0, %c0_0] : memref<64x1xf32, #tpu.memory_space<vmem>>, vector<64x1xf32>
    %c0_1 = arith.constant 0 : index
    %c0_2 = arith.constant 0 : index
    %1 = vector.load %arg2[%c0_1, %c0_2] : memref<1x32xf32, #tpu.memory_space<vmem>>, vector<1x32xf32>
    %2 = vector.broadcast %0 : vector<64x1xf32> to vector<64x32xf32>
    %3 = vector.broadcast %1 : vector<1x32xf32> to vector<64x32xf32>
    %4 = arith.mulf %2, %3 : vector<64x32xf32>
    %c0_3 = arith.constant 0 : index
    %c0_4 = arith.constant 0 : index
    %5 = vector.load %arg3[%c0_3, %c0_4] : memref<1x32xf32, #tpu.memory_space<vmem>>, vector<1x32xf32>
    %6 = vector.broadcast %5 : vector<1x32xf32> to vector<64x32xf32>
    %7 = arith.addf %4, %6 : vector<64x32xf32>
    %8 = tpu.iota {dimensions = array<i32: 1>} : vector<64x32xi32>
    %c0_i32 = arith.constant 0 : i32
    %9 = vector.broadcast %c0_i32 : i32 to vector<64x32xi32>
    %10 = arith.cmpi eq, %8, %9 : vector<64x32xi32>
    %11 = math.sin %7 : vector<64x32xf32>
    %12 = arith.select %10, %7, %11 : vector<64x32xi1>, vector<64x32xf32>
    %c0_5 = arith.constant 0 : index
    %c0_6 = arith.constant 0 : index
    %13 = vector.load %arg4[%c0_5, %c0_6] : memref<64x32xf32, #tpu.memory_space<vmem>>, vector<64x32xf32>
    tpu.vector_store %arg4[%c0_5, %c0_6], %12 {strides = array<i32>} : memref<64x32xf32, #tpu.memory_space<vmem>>, vector<64x32xf32>,
    return
  }
  func.func @transform_0(%arg0: i32) -> (i32, i32) {
    %c0_i32 = arith.constant 0 : i32
    %c0_i32_0 = arith.constant 0 : i32
    return %arg0, %c0_i32 : i32, i32
  }
  func.func @transform_1(%arg0: i32) -> (i32, i32) {
    %c0_i32 = arith.constant 0 : i32
    %c0_i32_0 = arith.constant 0 : i32
    %c0_i32_1 = arith.constant 0 : i32
    return %c0_i32, %c0_i32_0 : i32, i32
  }
  func.func @transform_2(%arg0: i32) -> (i32, i32) {
    %c0_i32 = arith.constant 0 : i32
    %c0_i32_0 = arith.constant 0 : i32
    %c0_i32_1 = arith.constant 0 : i32
    return %c0_i32, %c0_i32_0 : i32, i32
  }
  func.func @transform_3(%arg0: i32) -> (i32, i32) {
    %c0_i32 = arith.constant 0 : i32
    %c0_i32_0 = arith.constant 0 : i32
    return %arg0, %c0_i32 : i32, i32
  }
}

</mosaic_0001>

<llo_original>
// kernel: tpu_custom_call.1
$region0: #{tpu_custom_call.1}
  #allocation0 [shape = 'u32[]', space=smem, size = 0x4, offset = 0x4, fixed_abs, tag = 'smem constant byte address 0x4 - core index']
  #allocation1 [shape = 'u32[144,128]{1,0:T(1,128)}', space=vmem, size = 0x12000, scoped, tag = 'internal scratch']
  %s0 = inlined_call_operand.vmem [shape: f32[64,1], index: 0, kind: input, shape index: {}]
  %s1 = inlined_call_operand.vmem [shape: f32[1,32], index: 1, kind: input, shape index: {}]
  %s2 = inlined_call_operand.vmem [shape: f32[1,32], index: 2, kind: input, shape index: {}]
  %s3 = inlined_call_operand.vmem [shape: f32[64,32], index: 3, kind: output, shape index: {}]
  %s4 = sld [smem:[#allocation0]]
  $region22: #{tpu_custom_call.1} parent=0
    _
  %s6 = ssub.s32 1, %s4
  %s7 = scalar_select 0, %s6, %s4
  // Predicated region
  $region2: #{tpu_custom_call.1} parent=0 // pred_check
    _
  $region3: #{tpu_custom_call.1} parent=0 // pred_check_branch
    %9 = sbr.rel (0) target = $region5
  $region4: #{tpu_custom_call.1} parent=0 // pred_region
    _
  $region5: #{tpu_custom_call.1} parent=0 // pred_fallthru
    _
  // Predicated region
  $region6: #{tpu_custom_call.1} parent=0 // pred_check
    _
  $region7: #{tpu_custom_call.1} parent=0 // pred_check_branch
    %11 = sbr.rel (0) target = $region9
  $region8: #{tpu_custom_call.1} parent=0 // pred_region
    _
  $region9: #{tpu_custom_call.1} parent=0 // pred_fallthru
    _
  // Predicated region
  $region10: #{tpu_custom_call.1} parent=0 // pred_check
    _
  $region11: #{tpu_custom_call.1} parent=0 // pred_check_branch
    %13 = sbr.rel (0) target = $region13
  $region12: #{tpu_custom_call.1} parent=0 // pred_region
    _
  $region13: #{tpu_custom_call.1} parent=0 // pred_fallthru
    _
  %v14 = vld [vmem:[%s0] sm:$0xff]
  %v15 = vld [vmem:[%s0 + $0x8] sm:$0xff]
  %v16 = vld [vmem:[%s0 + $0x10] sm:$0xff]
  %v17 = vld [vmem:[%s0 + $0x18] sm:$0xff]
  %v18 = vld [vmem:[%s0 + $0x20] sm:$0xff]
  %v19 = vld [vmem:[%s0 + $0x28] sm:$0xff]
  %v20 = vld [vmem:[%s0 + $0x30] sm:$0xff]
  %v21 = vld [vmem:[%s0 + $0x38] sm:$0xff]
  %v22 = vld [vmem:[%s1] sm:$0x1]
  %24 = vset.pattern.permute.xlu0 0
  %25 = vperm.xlu0 %24, %v14
  %v26 = vpop.permute.xlu0 %25
  %29 = vset.pattern.permute.xlu0 0
  %30 = vperm.xlu0 %29, %v15
  %v31 = vpop.permute.xlu0 %30
  %34 = vset.pattern.permute.xlu0 0
  %35 = vperm.xlu0 %34, %v16
  %v36 = vpop.permute.xlu0 %35
  %39 = vset.pattern.permute.xlu0 0
  %40 = vperm.xlu0 %39, %v17
  %v41 = vpop.permute.xlu0 %40
  %44 = vset.pattern.permute.xlu0 0
  %45 = vperm.xlu0 %44, %v18
  %v46 = vpop.permute.xlu0 %45
  %49 = vset.pattern.permute.xlu0 0
  %50 = vperm.xlu0 %49, %v19
  %v51 = vpop.permute.xlu0 %50
  %54 = vset.pattern.permute.xlu0 0
  %55 = vperm.xlu0 %54, %v20
  %v56 = vpop.permute.xlu0 %55
  %59 = vset.pattern.permute.xlu0 0
  %60 = vperm.xlu0 %59, %v21
  %v61 = vpop.permute.xlu0 %60
  %v64 = vlaneseq
  %v65 = vshrl.u32 %v64, 7
  %v66 = vsub.s32 0, %v65
  %v67 = vrot.slane %v22, %v66
  %v69 = vmul.f32 %v26, %v67
  %v70 = vmul.f32 %v31, %v67
  %v71 = vmul.f32 %v36, %v67
  %v72 = vmul.f32 %v41, %v67
  %v73 = vmul.f32 %v46, %v67
  %v74 = vmul.f32 %v51, %v67
  %v75 = vmul.f32 %v56, %v67
  %v76 = vmul.f32 %v61, %v67
  %v77 = vld [vmem:[%s2] sm:$0x1]
  %v79 = vlaneseq
  %v80 = vshrl.u32 %v79, 7
  %v81 = vsub.s32 0, %v80
  %v82 = vrot.slane %v77, %v81
  %v84 = vadd.f32 %v69, %v82
  %v85 = vadd.f32 %v70, %v82
  %v86 = vadd.f32 %v71, %v82
  %v87 = vadd.f32 %v72, %v82
  %v88 = vadd.f32 %v73, %v82
  %v89 = vadd.f32 %v74, %v82
  %v90 = vadd.f32 %v75, %v82
  %v91 = vadd.f32 %v76, %v82
  %v92 = vlaneseq
  %v93 = vand.u32 %v92, 127
  %vm94 = vcmp.eq.s32.totalorder %v93, 0
  %v95 = vand.u32 2147483647, %v84
  %vm96 = vcmp.le.f32.partialorder %v95, 0.7853982
  %vm97 = vcmp.lt.s32.totalorder %v84, 0
  %v98 = vand.u32 %v84, 2139095040
  %v99 = vshrl.u32 %v98, 23
  %v100 = vsub.s32 %v99, 127
  %v101 = vand.u32 2147483647, %v84
  %v102 = vand.u32 %v101, 8388607
  %v103 = vor.u32 %v102, 8388608
  %v104 = vsub.s32 0, %v103
  %v105 = vadd.s32 %v100, 1
  %vm106 = vcmp.gt.s32.totalorder %v105, 0
  %v107 = vsel %vm106, %v105, 0
  %v108 = vshrl.u32 %v107, 5
  %v109 = vand.u32 %v107, 31
  %v110 = vsub.s32 32, %v109
  %v111 = vshrl.u32 683565275, %v110
  %v112 = vshll.u32 683565275, %v109
  %v113 = vshrl.u32 2475754826, %v110
  %v114 = vor.u32 %v112, %v113
  %v115 = vshll.u32 2475754826, %v109
  %v116 = vshrl.u32 2131351028, %v110
  %v117 = vor.u32 %v115, %v116
  %v118 = vshll.u32 2131351028, %v109
  %v119 = vshrl.u32 2102212464, %v110
  %v120 = vor.u32 %v118, %v119
  %v121 = vshll.u32 2102212464, %v109
  %v122 = vshrl.u32 920167782, %v110
  %v123 = vor.u32 %v121, %v122
  %v124 = vshll.u32 920167782, %v109
  %v125 = vshrl.u32 1326507024, %v110
  %v126 = vor.u32 %v124, %v125
  %vm127 = vcmp.lt.s32.totalorder %v108, 1
  %vm128 = vcmp.lt.s32.totalorder %v108, 2
  %vm129 = vcmp.lt.s32.totalorder %v108, 3
  %vm130 = vcmp.lt.s32.totalorder %v108, 4
  %v131 = vsel %vm127, %v111, %v114
  %v132 = vsel %vm130, %v120, 2102212464
  %v133 = vsel %vm129, %v117, %v132
  %v134 = vsel %vm128, %v131, %v133
  %v135 = vsel %vm127, %v114, %v117
  %v136 = vsel %vm130, %v123, 920167782
  %v137 = vsel %vm129, %v120, %v136
  %v138 = vsel %vm128, %v135, %v137
  %v139 = vsel %vm127, %v117, %v120
  %v140 = vsel %vm130, %v126, 1326507024
  %v141 = vsel %vm129, %v123, %v140
  %v142 = vsel %vm128, %v139, %v141
  %v143 = vshll.u32 %v103, 8
  %v144 = vmul.u32.u64.compose %v143, %v142
  %v145 = vextract.low.u32 %v144
  %v146 = vextract.high.u32 %v144
  %v147 = vmul.u32.u64.compose %v143, %v138
  %v148 = vextract.low.u32 %v147
  %v149 = vextract.high.u32 %v147
  %v150 = vmul.u32 %v143, %v134
  %v151 = vadd.s32 %v146, %v148
  %vm152 = vc.u32 %v146, %v148
  %v153 = vadd.s32 %v149, 1
  %v154 = vsel %vm152, %v153, %v149
  %v155 = vadd.s32 %v150, %v154
  %v156 = vadd.s32 %v155, 536870912
  %v157 = vshrl.u32 %v156, 30
  %v158 = vshll.u32 %v157, 30
  %v159 = vsub.s32 %v155, %v158
  %vm160 = vcmp.lt.s32.totalorder %v159, 0
  %v161 = vsub.s32 0, %v159
  %v162 = vsel %vm160, %v161, %v159
  %v163 = vclz %v162
  %v164 = vsub.s32 %v163, 2
  %vm165 = vcmp.gt.s32.totalorder 0, %v164
  %v166 = vsel %vm165, 0, %v164
  %v167 = vsub.s32 32, %v166
  %v168 = vshll.u32 %v159, %v166
  %v169 = vshrl.u32 %v151, %v167
  %v170 = vor.u32 %v168, %v169
  %v171 = vsub.s32 4294967266, %v166
  %v172 = vadd.s32 %v171, 127
  %v173 = vshll.u32 %v172, 23
  %v174 = vor.u32 4788187, %v173
  %v175 = vand.u32 2147483647, %v174
  %v177 = vcvt.s32.f32 %v170
  %v178 = vmul.f32 %v177, %v175
  %v179 = vxor.u32 %v178, 2147483648
  %v180 = vsel %vm97, %v179, %v178
  %v181 = vsub.s32 4, %v157
  %v182 = vsel %vm97, %v181, %v157
  %v183 = vsel %vm96, %v84, %v180
  %v184 = vsel %vm96, 0, %v182
  %v185 = vcosq.f32.pop %v183
  %v186 = vsinq.f32.pop %v183
  %vm187 = vweird.f32 %v84
  %v188 = vadd.s32 %v184, 3
  %v189 = vand.u32 %v188, 3
  %vm190 = vcmp.lt.s32.totalorder %v189, 2
  %vm191 = vcmp.eq.s32.totalorder %v189, 0
  %v192 = vxor.u32 %v186, 2147483648
  %v193 = vsel %vm191, %v185, %v192
  %vm194 = vcmp.eq.s32.totalorder %v189, 2
  %v195 = vxor.u32 %v185, 2147483648
  %v196 = vsel %vm194, %v195, %v186
  %v197 = vsel %vm190, %v193, %v196
  %v198 = vsel %vm187, nan, %v197
  %v199 = vand.u32 2147483647, %v85
  %vm200 = vcmp.le.f32.partialorder %v199, 0.7853982
  %vm201 = vcmp.lt.s32.totalorder %v85, 0
  %v202 = vand.u32 %v85, 2139095040
  %v203 = vshrl.u32 %v202, 23
  %v204 = vsub.s32 %v203, 127
  %v205 = vand.u32 2147483647, %v85
  %v206 = vand.u32 %v205, 8388607
  %v207 = vor.u32 %v206, 8388608
  %v208 = vsub.s32 0, %v207
  %v209 = vadd.s32 %v204, 1
  %vm210 = vcmp.gt.s32.totalorder %v209, 0
  %v211 = vsel %vm210, %v209, 0
  %v212 = vshrl.u32 %v211, 5
  %v213 = vand.u32 %v211, 31
  %v214 = vsub.s32 32, %v213
  %v215 = vshrl.u32 683565275, %v214
  %v216 = vshll.u32 683565275, %v213
  %v217 = vshrl.u32 2475754826, %v214
  %v218 = vor.u32 %v216, %v217
  %v219 = vshll.u32 2475754826, %v213
  %v220 = vshrl.u32 2131351028, %v214
  %v221 = vor.u32 %v219, %v220
  %v222 = vshll.u32 2131351028, %v213
  %v223 = vshrl.u32 2102212464, %v214
  %v224 = vor.u32 %v222, %v223
  %v225 = vshll.u32 2102212464, %v213
  %v226 = vshrl.u32 920167782, %v214
  %v227 = vor.u32 %v225, %v226
  %v228 = vshll.u32 920167782, %v213
  %v229 = vshrl.u32 1326507024, %v214
  %v230 = vor.u32 %v228, %v229
  %vm231 = vcmp.lt.s32.totalorder %v212, 1
  %vm232 = vcmp.lt.s32.totalorder %v212, 2
  %vm233 = vcmp.lt.s32.totalorder %v212, 3
  %vm234 = vcmp.lt.s32.totalorder %v212, 4
  %v235 = vsel %vm231, %v215, %v218
  %v236 = vsel %vm234, %v224, 2102212464
  %v237 = vsel %vm233, %v221, %v236
  %v238 = vsel %vm232, %v235, %v237
  %v239 = vsel %vm231, %v218, %v221
  %v240 = vsel %vm234, %v227, 920167782
  %v241 = vsel %vm233, %v224, %v240
  %v242 = vsel %vm232, %v239, %v241
  %v243 = vsel %vm231, %v221, %v224
  %v244 = vsel %vm234, %v230, 1326507024
  %v245 = vsel %vm233, %v227, %v244
  %v246 = vsel %vm232, %v243, %v245
  %v247 = vshll.u32 %v207, 8
  %v248 = vmul.u32.u64.compose %v247, %v246
  %v249 = vextract.low.u32 %v248
  %v250 = vextract.high.u32 %v248
  %v251 = vmul.u32.u64.compose %v247, %v242
  %v252 = vextract.low.u32 %v251
  %v253 = vextract.high.u32 %v251
  %v254 = vmul.u32 %v247, %v238
  %v255 = vadd.s32 %v250, %v252
  %vm256 = vc.u32 %v250, %v252
  %v257 = vadd.s32 %v253, 1
  %v258 = vsel %vm256, %v257, %v253
  %v259 = vadd.s32 %v254, %v258
  %v260 = vadd.s32 %v259, 536870912
  %v261 = vshrl.u32 %v260, 30
  %v262 = vshll.u32 %v261, 30
  %v263 = vsub.s32 %v259, %v262
  %vm264 = vcmp.lt.s32.totalorder %v263, 0
  %v265 = vsub.s32 0, %v263
  %v266 = vsel %vm264, %v265, %v263
  %v267 = vclz %v266
  %v268 = vsub.s32 %v267, 2
  %vm269 = vcmp.gt.s32.totalorder 0, %v268
  %v270 = vsel %vm269, 0, %v268
  %v271 = vsub.s32 32, %v270
  %v272 = vshll.u32 %v263, %v270
  %v273 = vshrl.u32 %v255, %v271
  %v274 = vor.u32 %v272, %v273
  %v275 = vsub.s32 4294967266, %v270
  %v276 = vadd.s32 %v275, 127
  %v277 = vshll.u32 %v276, 23
  %v278 = vor.u32 4788187, %v277
  %v279 = vand.u32 2147483647, %v278
  %v281 = vcvt.s32.f32 %v274
  %v282 = vmul.f32 %v281, %v279
  %v283 = vxor.u32 %v282, 2147483648
  %v284 = vsel %vm201, %v283, %v282
  %v285 = vsub.s32 4, %v261
  %v286 = vsel %vm201, %v285, %v261
  %v287 = vsel %vm200, %v85, %v284
  %v288 = vsel %vm200, 0, %v286
  %v289 = vcosq.f32.pop %v287
  %v290 = vsinq.f32.pop %v287
  %vm291 = vweird.f32 %v85
  %v292 = vadd.s32 %v288, 3
  %v293 = vand.u32 %v292, 3
  %vm294 = vcmp.lt.s32.totalorder %v293, 2
  %vm295 = vcmp.eq.s32.totalorder %v293, 0
  %v296 = vxor.u32 %v290, 2147483648
  %v297 = vsel %vm295, %v289, %v296
  %vm298 = vcmp.eq.s32.totalorder %v293, 2
  %v299 = vxor.u32 %v289, 2147483648
  %v300 = vsel %vm298, %v299, %v290
  %v301 = vsel %vm294, %v297, %v300
  %v302 = vsel %vm291, nan, %v301
  %v303 = vand.u32 2147483647, %v86
  %vm304 = vcmp.le.f32.partialorder %v303, 0.7853982
  %vm305 = vcmp.lt.s32.totalorder %v86, 0
  %v306 = vand.u32 %v86, 2139095040
  %v307 = vshrl.u32 %v306, 23
  %v308 = vsub.s32 %v307, 127
  %v309 = vand.u32 2147483647, %v86
  %v310 = vand.u32 %v309, 8388607
  %v311 = vor.u32 %v310, 8388608
  %v312 = vsub.s32 0, %v311
  %v313 = vadd.s32 %v308, 1
  %vm314 = vcmp.gt.s32.totalorder %v313, 0
  %v315 = vsel %vm314, %v313, 0
  %v316 = vshrl.u32 %v315, 5
  %v317 = vand.u32 %v315, 31
  %v318 = vsub.s32 32, %v317
  %v319 = vshrl.u32 683565275, %v318
  %v320 = vshll.u32 683565275, %v317
  %v321 = vshrl.u32 2475754826, %v318
  %v322 = vor.u32 %v320, %v321
  %v323 = vshll.u32 2475754826, %v317
  %v324 = vshrl.u32 2131351028, %v318
  %v325 = vor.u32 %v323, %v324
  %v326 = vshll.u32 2131351028, %v317
  %v327 = vshrl.u32 2102212464, %v318
  %v328 = vor.u32 %v326, %v327
  %v329 = vshll.u32 2102212464, %v317
  %v330 = vshrl.u32 920167782, %v318
  %v331 = vor.u32 %v329, %v330
  %v332 = vshll.u32 920167782, %v317
  %v333 = vshrl.u32 1326507024, %v318
  %v334 = vor.u32 %v332, %v333
  %vm335 = vcmp.lt.s32.totalorder %v316, 1
  %vm336 = vcmp.lt.s32.totalorder %v316, 2
  %vm337 = vcmp.lt.s32.totalorder %v316, 3
  %vm338 = vcmp.lt.s32.totalorder %v316, 4
  %v339 = vsel %vm335, %v319, %v322
  %v340 = vsel %vm338, %v328, 2102212464
  %v341 = vsel %vm337, %v325, %v340
  %v342 = vsel %vm336, %v339, %v341
  %v343 = vsel %vm335, %v322, %v325
  %v344 = vsel %vm338, %v331, 920167782
  %v345 = vsel %vm337, %v328, %v344
  %v346 = vsel %vm336, %v343, %v345
  %v347 = vsel %vm335, %v325, %v328
  %v348 = vsel %vm338, %v334, 1326507024
  %v349 = vsel %vm337, %v331, %v348
  %v350 = vsel %vm336, %v347, %v349
  %v351 = vshll.u32 %v311, 8
  %v352 = vmul.u32.u64.compose %v351, %v350
  %v353 = vextract.low.u32 %v352
  %v354 = vextract.high.u32 %v352
  %v355 = vmul.u32.u64.compose %v351, %v346
  %v356 = vextract.low.u32 %v355
  %v357 = vextract.high.u32 %v355
  %v358 = vmul.u32 %v351, %v342
  %v359 = vadd.s32 %v354, %v356
  %vm360 = vc.u32 %v354, %v356
  %v361 = vadd.s32 %v357, 1
  %v362 = vsel %vm360, %v361, %v357
  %v363 = vadd.s32 %v358, %v362
  %v364 = vadd.s32 %v363, 536870912
  %v365 = vshrl.u32 %v364, 30
  %v366 = vshll.u32 %v365, 30
  %v367 = vsub.s32 %v363, %v366
  %vm368 = vcmp.lt.s32.totalorder %v367, 0
  %v369 = vsub.s32 0, %v367
  %v370 = vsel %vm368, %v369, %v367
  %v371 = vclz %v370
  %v372 = vsub.s32 %v371, 2
  %vm373 = vcmp.gt.s32.totalorder 0, %v372
  %v374 = vsel %vm373, 0, %v372
  %v375 = vsub.s32 32, %v374
  %v376 = vshll.u32 %v367, %v374
  %v377 = vshrl.u32 %v359, %v375
  %v378 = vor.u32 %v376, %v377
  %v379 = vsub.s32 4294967266, %v374
  %v380 = vadd.s32 %v379, 127
  %v381 = vshll.u32 %v380, 23
  %v382 = vor.u32 4788187, %v381
  %v383 = vand.u32 2147483647, %v382
  %v385 = vcvt.s32.f32 %v378
  %v386 = vmul.f32 %v385, %v383
  %v387 = vxor.u32 %v386, 2147483648
  %v388 = vsel %vm305, %v387, %v386
  %v389 = vsub.s32 4, %v365
  %v390 = vsel %vm305, %v389, %v365
  %v391 = vsel %vm304, %v86, %v388
  %v392 = vsel %vm304, 0, %v390
  %v393 = vcosq.f32.pop %v391
  %v394 = vsinq.f32.pop %v391
  %vm395 = vweird.f32 %v86
  %v396 = vadd.s32 %v392, 3
  %v397 = vand.u32 %v396, 3
  %vm398 = vcmp.lt.s32.totalorder %v397, 2
  %vm399 = vcmp.eq.s32.totalorder %v397, 0
  %v400 = vxor.u32 %v394, 2147483648
  %v401 = vsel %vm399, %v393, %v400
  %vm402 = vcmp.eq.s32.totalorder %v397, 2
  %v403 = vxor.u32 %v393, 2147483648
  %v404 = vsel %vm402, %v403, %v394
  %v405 = vsel %vm398, %v401, %v404
  %v406 = vsel %vm395, nan, %v405
  %v407 = vand.u32 2147483647, %v87
  %vm408 = vcmp.le.f32.partialorder %v407, 0.7853982
  %vm409 = vcmp.lt.s32.totalorder %v87, 0
  %v410 = vand.u32 %v87, 2139095040
  %v411 = vshrl.u32 %v410, 23
  %v412 = vsub.s32 %v411, 127
  %v413 = vand.u32 2147483647, %v87
  %v414 = vand.u32 %v413, 8388607
  %v415 = vor.u32 %v414, 8388608
  %v416 = vsub.s32 0, %v415
  %v417 = vadd.s32 %v412, 1
  %vm418 = vcmp.gt.s32.totalorder %v417, 0
  %v419 = vsel %vm418, %v417, 0
  %v420 = vshrl.u32 %v419, 5
  %v421 = vand.u32 %v419, 31
  %v422 = vsub.s32 32, %v421
  %v423 = vshrl.u32 683565275, %v422
  %v424 = vshll.u32 683565275, %v421
  %v425 = vshrl.u32 2475754826, %v422
  %v426 = vor.u32 %v424, %v425
  %v427 = vshll.u32 2475754826, %v421
  %v428 = vshrl.u32 2131351028, %v422
  %v429 = vor.u32 %v427, %v428
  %v430 = vshll.u32 2131351028, %v421
  %v431 = vshrl.u32 2102212464, %v422
  %v432 = vor.u32 %v430, %v431
  %v433 = vshll.u32 2102212464, %v421
  %v434 = vshrl.u32 920167782, %v422
  %v435 = vor.u32 %v433, %v434
  %v436 = vshll.u32 920167782, %v421
  %v437 = vshrl.u32 1326507024, %v422
  %v438 = vor.u32 %v436, %v437
  %vm439 = vcmp.lt.s32.totalorder %v420, 1
  %vm440 = vcmp.lt.s32.totalorder %v420, 2
  %vm441 = vcmp.lt.s32.totalorder %v420, 3
  %vm442 = vcmp.lt.s32.totalorder %v420, 4
  %v443 = vsel %vm439, %v423, %v426
  %v444 = vsel %vm442, %v432, 2102212464
  %v445 = vsel %vm441, %v429, %v444
  %v446 = vsel %vm440, %v443, %v445
  %v447 = vsel %vm439, %v426, %v429
  %v448 = vsel %vm442, %v435, 920167782
  %v449 = vsel %vm441, %v432, %v448
  %v450 = vsel %vm440, %v447, %v449
  %v451 = vsel %vm439, %v429, %v432
  %v452 = vsel %vm442, %v438, 1326507024
  %v453 = vsel %vm441, %v435, %v452
  %v454 = vsel %vm440, %v451, %v453
  %v455 = vshll.u32 %v415, 8
  %v456 = vmul.u32.u64.compose %v455, %v454
  %v457 = vextract.low.u32 %v456
  %v458 = vextract.high.u32 %v456
  %v459 = vmul.u32.u64.compose %v455, %v450
  %v460 = vextract.low.u32 %v459
  %v461 = vextract.high.u32 %v459
  %v462 = vmul.u32 %v455, %v446
  %v463 = vadd.s32 %v458, %v460
  %vm464 = vc.u32 %v458, %v460
  %v465 = vadd.s32 %v461, 1
  %v466 = vsel %vm464, %v465, %v461
  %v467 = vadd.s32 %v462, %v466
  %v468 = vadd.s32 %v467, 536870912
  %v469 = vshrl.u32 %v468, 30
  %v470 = vshll.u32 %v469, 30
  %v471 = vsub.s32 %v467, %v470
  %vm472 = vcmp.lt.s32.totalorder %v471, 0
  %v473 = vsub.s32 0, %v471
  %v474 = vsel %vm472, %v473, %v471
  %v475 = vclz %v474
  %v476 = vsub.s32 %v475, 2
  %vm477 = vcmp.gt.s32.totalorder 0, %v476
  %v478 = vsel %vm477, 0, %v476
  %v479 = vsub.s32 32, %v478
  %v480 = vshll.u32 %v471, %v478
  %v481 = vshrl.u32 %v463, %v479
  %v482 = vor.u32 %v480, %v481
  %v483 = vsub.s32 4294967266, %v478
  %v484 = vadd.s32 %v483, 127
  %v485 = vshll.u32 %v484, 23
  %v486 = vor.u32 4788187, %v485
  %v487 = vand.u32 2147483647, %v486
  %v489 = vcvt.s32.f32 %v482
  %v490 = vmul.f32 %v489, %v487
  %v491 = vxor.u32 %v490, 2147483648
  %v492 = vsel %vm409, %v491, %v490
  %v493 = vsub.s32 4, %v469
  %v494 = vsel %vm409, %v493, %v469
  %v495 = vsel %vm408, %v87, %v492
  %v496 = vsel %vm408, 0, %v494
  %v497 = vcosq.f32.pop %v495
  %v498 = vsinq.f32.pop %v495
  %vm499 = vweird.f32 %v87
  %v500 = vadd.s32 %v496, 3
  %v501 = vand.u32 %v500, 3
  %vm502 = vcmp.lt.s32.totalorder %v501, 2
  %vm503 = vcmp.eq.s32.totalorder %v501, 0
  %v504 = vxor.u32 %v498, 2147483648
  %v505 = vsel %vm503, %v497, %v504
  %vm506 = vcmp.eq.s32.totalorder %v501, 2
  %v507 = vxor.u32 %v497, 2147483648
  %v508 = vsel %vm506, %v507, %v498
  %v509 = vsel %vm502, %v505, %v508
  %v510 = vsel %vm499, nan, %v509
  %v511 = vand.u32 2147483647, %v88
  %vm512 = vcmp.le.f32.partialorder %v511, 0.7853982
  %vm513 = vcmp.lt.s32.totalorder %v88, 0
  %v514 = vand.u32 %v88, 2139095040
  %v515 = vshrl.u32 %v514, 23
  %v516 = vsub.s32 %v515, 127
  %v517 = vand.u32 2147483647, %v88
  %v518 = vand.u32 %v517, 8388607
  %v519 = vor.u32 %v518, 8388608
  %v520 = vsub.s32 0, %v519
  %v521 = vadd.s32 %v516, 1
  %vm522 = vcmp.gt.s32.totalorder %v521, 0
  %v523 = vsel %vm522, %v521, 0
  %v524 = vshrl.u32 %v523, 5
  %v525 = vand.u32 %v523, 31
  %v526 = vsub.s32 32, %v525
  %v527 = vshrl.u32 683565275, %v526
  %v528 = vshll.u32 683565275, %v525
  %v529 = vshrl.u32 2475754826, %v526
  %v530 = vor.u32 %v528, %v529
  %v531 = vshll.u32 2475754826, %v525
  %v532 = vshrl.u32 2131351028, %v526
  %v533 = vor.u32 %v531, %v532
  %v534 = vshll.u32 2131351028, %v525
  %v535 = vshrl.u32 2102212464, %v526
  %v536 = vor.u32 %v534, %v535
  %v537 = vshll.u32 2102212464, %v525
  %v538 = vshrl.u32 920167782, %v526
  %v539 = vor.u32 %v537, %v538
  %v540 = vshll.u32 920167782, %v525
  %v541 = vshrl.u32 1326507024, %v526
  %v542 = vor.u32 %v540, %v541
  %vm543 = vcmp.lt.s32.totalorder %v524, 1
  %vm544 = vcmp.lt.s32.totalorder %v524, 2
  %vm545 = vcmp.lt.s32.totalorder %v524, 3
  %vm546 = vcmp.lt.s32.totalorder %v524, 4
  %v547 = vsel %vm543, %v527, %v530
  %v548 = vsel %vm546, %v536, 2102212464
  %v549 = vsel %vm545, %v533, %v548
  %v550 = vsel %vm544, %v547, %v549
  %v551 = vsel %vm543, %v530, %v533
  %v552 = vsel %vm546, %v539, 920167782
  %v553 = vsel %vm545, %v536, %v552
  %v554 = vsel %vm544, %v551, %v553
  %v555 = vsel %vm543, %v533, %v536
  %v556 = vsel %vm546, %v542, 1326507024
  %v557 = vsel %vm545, %v539, %v556
  %v558 = vsel %vm544, %v555, %v557
  %v559 = vshll.u32 %v519, 8
  %v560 = vmul.u32.u64.compose %v559, %v558
  %v561 = vextract.low.u32 %v560
  %v562 = vextract.high.u32 %v560
  %v563 = vmul.u32.u64.compose %v559, %v554
  %v564 = vextract.low.u32 %v563
  %v565 = vextract.high.u32 %v563
  %v566 = vmul.u32 %v559, %v550
  %v567 = vadd.s32 %v562, %v564
  %vm568 = vc.u32 %v562, %v564
  %v569 = vadd.s32 %v565, 1
  %v570 = vsel %vm568, %v569, %v565
  %v571 = vadd.s32 %v566, %v570
  %v572 = vadd.s32 %v571, 536870912
  %v573 = vshrl.u32 %v572, 30
  %v574 = vshll.u32 %v573, 30
  %v575 = vsub.s32 %v571, %v574
  %vm576 = vcmp.lt.s32.totalorder %v575, 0
  %v577 = vsub.s32 0, %v575
  %v578 = vsel %vm576, %v577, %v575
  %v579 = vclz %v578
  %v580 = vsub.s32 %v579, 2
  %vm581 = vcmp.gt.s32.totalorder 0, %v580
  %v582 = vsel %vm581, 0, %v580
  %v583 = vsub.s32 32, %v582
  %v584 = vshll.u32 %v575, %v582
  %v585 = vshrl.u32 %v567, %v583
  %v586 = vor.u32 %v584, %v585
  %v587 = vsub.s32 4294967266, %v582
  %v588 = vadd.s32 %v587, 127
  %v589 = vshll.u32 %v588, 23
  %v590 = vor.u32 4788187, %v589
  %v591 = vand.u32 2147483647, %v590
  %v593 = vcvt.s32.f32 %v586
  %v594 = vmul.f32 %v593, %v591
  %v595 = vxor.u32 %v594, 2147483648
  %v596 = vsel %vm513, %v595, %v594
  %v597 = vsub.s32 4, %v573
  %v598 = vsel %vm513, %v597, %v573
  %v599 = vsel %vm512, %v88, %v596
  %v600 = vsel %vm512, 0, %v598
  %v601 = vcosq.f32.pop %v599
  %v602 = vsinq.f32.pop %v599
  %vm603 = vweird.f32 %v88
  %v604 = vadd.s32 %v600, 3
  %v605 = vand.u32 %v604, 3
  %vm606 = vcmp.lt.s32.totalorder %v605, 2
  %vm607 = vcmp.eq.s32.totalorder %v605, 0
  %v608 = vxor.u32 %v602, 2147483648
  %v609 = vsel %vm607, %v601, %v608
  %vm610 = vcmp.eq.s32.totalorder %v605, 2
  %v611 = vxor.u32 %v601, 2147483648
  %v612 = vsel %vm610, %v611, %v602
  %v613 = vsel %vm606, %v609, %v612
  %v614 = vsel %vm603, nan, %v613
  %v615 = vand.u32 2147483647, %v89
  %vm616 = vcmp.le.f32.partialorder %v615, 0.7853982
  %vm617 = vcmp.lt.s32.totalorder %v89, 0
  %v618 = vand.u32 %v89, 2139095040
  %v619 = vshrl.u32 %v618, 23
  %v620 = vsub.s32 %v619, 127
  %v621 = vand.u32 2147483647, %v89
  %v622 = vand.u32 %v621, 8388607
  %v623 = vor.u32 %v622, 8388608
  %v624 = vsub.s32 0, %v623
  %v625 = vadd.s32 %v620, 1
  %vm626 = vcmp.gt.s32.totalorder %v625, 0
  %v627 = vsel %vm626, %v625, 0
  %v628 = vshrl.u32 %v627, 5
  %v629 = vand.u32 %v627, 31
  %v630 = vsub.s32 32, %v629
  %v631 = vshrl.u32 683565275, %v630
  %v632 = vshll.u32 683565275, %v629
  %v633 = vshrl.u32 2475754826, %v630
  %v634 = vor.u32 %v632, %v633
  %v635 = vshll.u32 2475754826, %v629
  %v636 = vshrl.u32 2131351028, %v630
  %v637 = vor.u32 %v635, %v636
  %v638 = vshll.u32 2131351028, %v629
  %v639 = vshrl.u32 2102212464, %v630
  %v640 = vor.u32 %v638, %v639
  %v641 = vshll.u32 2102212464, %v629
  %v642 = vshrl.u32 920167782, %v630
  %v643 = vor.u32 %v641, %v642
  %v644 = vshll.u32 920167782, %v629
  %v645 = vshrl.u32 1326507024, %v630
  %v646 = vor.u32 %v644, %v645
  %vm647 = vcmp.lt.s32.totalorder %v628, 1
  %vm648 = vcmp.lt.s32.totalorder %v628, 2
  %vm649 = vcmp.lt.s32.totalorder %v628, 3
  %vm650 = vcmp.lt.s32.totalorder %v628, 4
  %v651 = vsel %vm647, %v631, %v634
  %v652 = vsel %vm650, %v640, 2102212464
  %v653 = vsel %vm649, %v637, %v652
  %v654 = vsel %vm648, %v651, %v653
  %v655 = vsel %vm647, %v634, %v637
  %v656 = vsel %vm650, %v643, 920167782
  %v657 = vsel %vm649, %v640, %v656
  %v658 = vsel %vm648, %v655, %v657
  %v659 = vsel %vm647, %v637, %v640
  %v660 = vsel %vm650, %v646, 1326507024
  %v661 = vsel %vm649, %v643, %v660
  %v662 = vsel %vm648, %v659, %v661
  %v663 = vshll.u32 %v623, 8
  %v664 = vmul.u32.u64.compose %v663, %v662
  %v665 = vextract.low.u32 %v664
  %v666 = vextract.high.u32 %v664
  %v667 = vmul.u32.u64.compose %v663, %v658
  %v668 = vextract.low.u32 %v667
  %v669 = vextract.high.u32 %v667
  %v670 = vmul.u32 %v663, %v654
  %v671 = vadd.s32 %v666, %v668
  %vm672 = vc.u32 %v666, %v668
  %v673 = vadd.s32 %v669, 1
  %v674 = vsel %vm672, %v673, %v669
  %v675 = vadd.s32 %v670, %v674
  %v676 = vadd.s32 %v675, 536870912
  %v677 = vshrl.u32 %v676, 30
  %v678 = vshll.u32 %v677, 30
  %v679 = vsub.s32 %v675, %v678
  %vm680 = vcmp.lt.s32.totalorder %v679, 0
  %v681 = vsub.s32 0, %v679
  %v682 = vsel %vm680, %v681, %v679
  %v683 = vclz %v682
  %v684 = vsub.s32 %v683, 2
  %vm685 = vcmp.gt.s32.totalorder 0, %v684
  %v686 = vsel %vm685, 0, %v684
  %v687 = vsub.s32 32, %v686
  %v688 = vshll.u32 %v679, %v686
  %v689 = vshrl.u32 %v671, %v687
  %v690 = vor.u32 %v688, %v689
  %v691 = vsub.s32 4294967266, %v686
  %v692 = vadd.s32 %v691, 127
  %v693 = vshll.u32 %v692, 23
  %v694 = vor.u32 4788187, %v693
  %v695 = vand.u32 2147483647, %v694
  %v697 = vcvt.s32.f32 %v690
  %v698 = vmul.f32 %v697, %v695
  %v699 = vxor.u32 %v698, 2147483648
  %v700 = vsel %vm617, %v699, %v698
  %v701 = vsub.s32 4, %v677
  %v702 = vsel %vm617, %v701, %v677
  %v703 = vsel %vm616, %v89, %v700
  %v704 = vsel %vm616, 0, %v702
  %v705 = vcosq.f32.pop %v703
  %v706 = vsinq.f32.pop %v703
  %vm707 = vweird.f32 %v89
  %v708 = vadd.s32 %v704, 3
  %v709 = vand.u32 %v708, 3
  %vm710 = vcmp.lt.s32.totalorder %v709, 2
  %vm711 = vcmp.eq.s32.totalorder %v709, 0
  %v712 = vxor.u32 %v706, 2147483648
  %v713 = vsel %vm711, %v705, %v712
  %vm714 = vcmp.eq.s32.totalorder %v709, 2
  %v715 = vxor.u32 %v705, 2147483648
  %v716 = vsel %vm714, %v715, %v706
  %v717 = vsel %vm710, %v713, %v716
  %v718 = vsel %vm707, nan, %v717
  %v719 = vand.u32 2147483647, %v90
  %vm720 = vcmp.le.f32.partialorder %v719, 0.7853982
  %vm721 = vcmp.lt.s32.totalorder %v90, 0
  %v722 = vand.u32 %v90, 2139095040
  %v723 = vshrl.u32 %v722, 23
  %v724 = vsub.s32 %v723, 127
  %v725 = vand.u32 2147483647, %v90
  %v726 = vand.u32 %v725, 8388607
  %v727 = vor.u32 %v726, 8388608
  %v728 = vsub.s32 0, %v727
  %v729 = vadd.s32 %v724, 1
  %vm730 = vcmp.gt.s32.totalorder %v729, 0
  %v731 = vsel %vm730, %v729, 0
  %v732 = vshrl.u32 %v731, 5
  %v733 = vand.u32 %v731, 31
  %v734 = vsub.s32 32, %v733
  %v735 = vshrl.u32 683565275, %v734
  %v736 = vshll.u32 683565275, %v733
  %v737 = vshrl.u32 2475754826, %v734
  %v738 = vor.u32 %v736, %v737
  %v739 = vshll.u32 2475754826, %v733
  %v740 = vshrl.u32 2131351028, %v734
  %v741 = vor.u32 %v739, %v740
  %v742 = vshll.u32 2131351028, %v733
  %v743 = vshrl.u32 2102212464, %v734
  %v744 = vor.u32 %v742, %v743
  %v745 = vshll.u32 2102212464, %v733
  %v746 = vshrl.u32 920167782, %v734
  %v747 = vor.u32 %v745, %v746
  %v748 = vshll.u32 920167782, %v733
  %v749 = vshrl.u32 1326507024, %v734
  %v750 = vor.u32 %v748, %v749
  %vm751 = vcmp.lt.s32.totalorder %v732, 1
  %vm752 = vcmp.lt.s32.totalorder %v732, 2
  %vm753 = vcmp.lt.s32.totalorder %v732, 3
  %vm754 = vcmp.lt.s32.totalorder %v732, 4
  %v755 = vsel %vm751, %v735, %v738
  %v756 = vsel %vm754, %v744, 2102212464
  %v757 = vsel %vm753, %v741, %v756
  %v758 = vsel %vm752, %v755, %v757
  %v759 = vsel %vm751, %v738, %v741
  %v760 = vsel %vm754, %v747, 920167782
  %v761 = vsel %vm753, %v744, %v760
  %v762 = vsel %vm752, %v759, %v761
  %v763 = vsel %vm751, %v741, %v744
  %v764 = vsel %vm754, %v750, 1326507024
  %v765 = vsel %vm753, %v747, %v764
  %v766 = vsel %vm752, %v763, %v765
  %v767 = vshll.u32 %v727, 8
  %v768 = vmul.u32.u64.compose %v767, %v766
  %v769 = vextract.low.u32 %v768
  %v770 = vextract.high.u32 %v768
  %v771 = vmul.u32.u64.compose %v767, %v762
  %v772 = vextract.low.u32 %v771
  %v773 = vextract.high.u32 %v771
  %v774 = vmul.u32 %v767, %v758
  %v775 = vadd.s32 %v770, %v772
  %vm776 = vc.u32 %v770, %v772
  %v777 = vadd.s32 %v773, 1
  %v778 = vsel %vm776, %v777, %v773
  %v779 = vadd.s32 %v774, %v778
  %v780 = vadd.s32 %v779, 536870912
  %v781 = vshrl.u32 %v780, 30
  %v782 = vshll.u32 %v781, 30
  %v783 = vsub.s32 %v779, %v782
  %vm784 = vcmp.lt.s32.totalorder %v783, 0
  %v785 = vsub.s32 0, %v783
  %v786 = vsel %vm784, %v785, %v783
  %v787 = vclz %v786
  %v788 = vsub.s32 %v787, 2
  %vm789 = vcmp.gt.s32.totalorder 0, %v788
  %v790 = vsel %vm789, 0, %v788
  %v791 = vsub.s32 32, %v790
  %v792 = vshll.u32 %v783, %v790
  %v793 = vshrl.u32 %v775, %v791
  %v794 = vor.u32 %v792, %v793
  %v795 = vsub.s32 4294967266, %v790
  %v796 = vadd.s32 %v795, 127
  %v797 = vshll.u32 %v796, 23
  %v798 = vor.u32 4788187, %v797
  %v799 = vand.u32 2147483647, %v798
  %v801 = vcvt.s32.f32 %v794
  %v802 = vmul.f32 %v801, %v799
  %v803 = vxor.u32 %v802, 2147483648
  %v804 = vsel %vm721, %v803, %v802
  %v805 = vsub.s32 4, %v781
  %v806 = vsel %vm721, %v805, %v781
  %v807 = vsel %vm720, %v90, %v804
  %v808 = vsel %vm720, 0, %v806
  %v809 = vcosq.f32.pop %v807
  %v810 = vsinq.f32.pop %v807
  %vm811 = vweird.f32 %v90
  %v812 = vadd.s32 %v808, 3
  %v813 = vand.u32 %v812, 3
  %vm814 = vcmp.lt.s32.totalorder %v813, 2
  %vm815 = vcmp.eq.s32.totalorder %v813, 0
  %v816 = vxor.u32 %v810, 2147483648
  %v817 = vsel %vm815, %v809, %v816
  %vm818 = vcmp.eq.s32.totalorder %v813, 2
  %v819 = vxor.u32 %v809, 2147483648
  %v820 = vsel %vm818, %v819, %v810
  %v821 = vsel %vm814, %v817, %v820
  %v822 = vsel %vm811, nan, %v821
  %v823 = vand.u32 2147483647, %v91
  %vm824 = vcmp.le.f32.partialorder %v823, 0.7853982
  %vm825 = vcmp.lt.s32.totalorder %v91, 0
  %v826 = vand.u32 %v91, 2139095040
  %v827 = vshrl.u32 %v826, 23
  %v828 = vsub.s32 %v827, 127
  %v829 = vand.u32 2147483647, %v91
  %v830 = vand.u32 %v829, 8388607
  %v831 = vor.u32 %v830, 8388608
  %v832 = vsub.s32 0, %v831
  %v833 = vadd.s32 %v828, 1
  %vm834 = vcmp.gt.s32.totalorder %v833, 0
  %v835 = vsel %vm834, %v833, 0
  %v836 = vshrl.u32 %v835, 5
  %v837 = vand.u32 %v835, 31
  %v838 = vsub.s32 32, %v837
  %v839 = vshrl.u32 683565275, %v838
  %v840 = vshll.u32 683565275, %v837
  %v841 = vshrl.u32 2475754826, %v838
  %v842 = vor.u32 %v840, %v841
  %v843 = vshll.u32 2475754826, %v837
  %v844 = vshrl.u32 2131351028, %v838
  %v845 = vor.u32 %v843, %v844
  %v846 = vshll.u32 2131351028, %v837
  %v847 = vshrl.u32 2102212464, %v838
  %v848 = vor.u32 %v846, %v847
  %v849 = vshll.u32 2102212464, %v837
  %v850 = vshrl.u32 920167782, %v838
  %v851 = vor.u32 %v849, %v850
  %v852 = vshll.u32 920167782, %v837
  %v853 = vshrl.u32 1326507024, %v838
  %v854 = vor.u32 %v852, %v853
  %vm855 = vcmp.lt.s32.totalorder %v836, 1
  %vm856 = vcmp.lt.s32.totalorder %v836, 2
  %vm857 = vcmp.lt.s32.totalorder %v836, 3
  %vm858 = vcmp.lt.s32.totalorder %v836, 4
  %v859 = vsel %vm855, %v839, %v842
  %v860 = vsel %vm858, %v848, 2102212464
  %v861 = vsel %vm857, %v845, %v860
  %v862 = vsel %vm856, %v859, %v861
  %v863 = vsel %vm855, %v842, %v845
  %v864 = vsel %vm858, %v851, 920167782
  %v865 = vsel %vm857, %v848, %v864
  %v866 = vsel %vm856, %v863, %v865
  %v867 = vsel %vm855, %v845, %v848
  %v868 = vsel %vm858, %v854, 1326507024
  %v869 = vsel %vm857, %v851, %v868
  %v870 = vsel %vm856, %v867, %v869
  %v871 = vshll.u32 %v831, 8
  %v872 = vmul.u32.u64.compose %v871, %v870
  %v873 = vextract.low.u32 %v872
  %v874 = vextract.high.u32 %v872
  %v875 = vmul.u32.u64.compose %v871, %v866
  %v876 = vextract.low.u32 %v875
  %v877 = vextract.high.u32 %v875
  %v878 = vmul.u32 %v871, %v862
  %v879 = vadd.s32 %v874, %v876
  %vm880 = vc.u32 %v874, %v876
  %v881 = vadd.s32 %v877, 1
  %v882 = vsel %vm880, %v881, %v877
  %v883 = vadd.s32 %v878, %v882
  %v884 = vadd.s32 %v883, 536870912
  %v885 = vshrl.u32 %v884, 30
  %v886 = vshll.u32 %v885, 30
  %v887 = vsub.s32 %v883, %v886
  %vm888 = vcmp.lt.s32.totalorder %v887, 0
  %v889 = vsub.s32 0, %v887
  %v890 = vsel %vm888, %v889, %v887
  %v891 = vclz %v890
  %v892 = vsub.s32 %v891, 2
  %vm893 = vcmp.gt.s32.totalorder 0, %v892
  %v894 = vsel %vm893, 0, %v892
  %v895 = vsub.s32 32, %v894
  %v896 = vshll.u32 %v887, %v894
  %v897 = vshrl.u32 %v879, %v895
  %v898 = vor.u32 %v896, %v897
  %v899 = vsub.s32 4294967266, %v894
  %v900 = vadd.s32 %v899, 127
  %v901 = vshll.u32 %v900, 23
  %v902 = vor.u32 4788187, %v901
  %v903 = vand.u32 2147483647, %v902
  %v905 = vcvt.s32.f32 %v898
  %v906 = vmul.f32 %v905, %v903
  %v907 = vxor.u32 %v906, 2147483648
  %v908 = vsel %vm825, %v907, %v906
  %v909 = vsub.s32 4, %v885
  %v910 = vsel %vm825, %v909, %v885
  %v911 = vsel %vm824, %v91, %v908
  %v912 = vsel %vm824, 0, %v910
  %v913 = vcosq.f32.pop %v911
  %v914 = vsinq.f32.pop %v911
  %vm915 = vweird.f32 %v91
  %v916 = vadd.s32 %v912, 3
  %v917 = vand.u32 %v916, 3
  %vm918 = vcmp.lt.s32.totalorder %v917, 2
  %vm919 = vcmp.eq.s32.totalorder %v917, 0
  %v920 = vxor.u32 %v914, 2147483648
  %v921 = vsel %vm919, %v913, %v920
  %vm922 = vcmp.eq.s32.totalorder %v917, 2
  %v923 = vxor.u32 %v913, 2147483648
  %v924 = vsel %vm922, %v923, %v914
  %v925 = vsel %vm918, %v921, %v924
  %v926 = vsel %vm915, nan, %v925
  %v927 = vsel %vm94, %v84, %v198
  %v928 = vsel %vm94, %v85, %v302
  %v929 = vsel %vm94, %v86, %v406
  %v930 = vsel %vm94, %v87, %v510
  %v931 = vsel %vm94, %v88, %v614
  %v932 = vsel %vm94, %v89, %v718
  %v933 = vsel %vm94, %v90, %v822
  %v934 = vsel %vm94, %v91, %v926
  %vm935 = vcmask 261120
  %936 = vst.msk [vmem:[%s3] sm:$0xff] %vm935, %v927
  %937 = vst.msk [vmem:[%s3 + $0x8] sm:$0xff] %vm935, %v928
  %938 = vst.msk [vmem:[%s3 + $0x10] sm:$0xff] %vm935, %v929
  %939 = vst.msk [vmem:[%s3 + $0x18] sm:$0xff] %vm935, %v930
  %940 = vst.msk [vmem:[%s3 + $0x20] sm:$0xff] %vm935, %v931
  %941 = vst.msk [vmem:[%s3 + $0x28] sm:$0xff] %vm935, %v932
  %942 = vst.msk [vmem:[%s3 + $0x30] sm:$0xff] %vm935, %v933
  %943 = vst.msk [vmem:[%s3 + $0x38] sm:$0xff] %vm935, %v934
  // Predicated region
  $region14: #{tpu_custom_call.1} parent=0 // pred_check
    _
  $region15: #{tpu_custom_call.1} parent=0 // pred_check_branch
    %945 = sbr.rel (0) target = $region17
  $region16: #{tpu_custom_call.1} parent=0 // pred_region
    _
  $region17: #{tpu_custom_call.1} parent=0 // pred_fallthru
    _
  // Predicated region
  $region18: #{tpu_custom_call.1} parent=0 // pred_check
    _
  $region19: #{tpu_custom_call.1} parent=0 // pred_check_branch
    %947 = sbr.rel (0) target = $region21
  $region20: #{tpu_custom_call.1} parent=0 // pred_region
    _
  $region21: #{tpu_custom_call.1} parent=0 // pred_fallthru
    _

</llo_original>
